<compile_context>
chip_gen: v7x
topology: tpu7x:2x2x1
jax: 0.10.0
libtpu: 0.0.40
codegen_flags: <defaults>
</compile_context>

<pallas_src>
import functools

import jax
import jax.numpy as jnp
from jax.experimental import pallas as pl
from jax.experimental.pallas import tpu as pltpu

_LANES = 128
_MAX_TILE_ROWS = 1024  # 1024 x 128 x 4B = 512 KiB per f32 buffer (fits v5e/v6e/v7x)


def _round_up(a, b):
    return ((a + b - 1) // b) * b


def _diffusion_kernel(nl_ref, x_ref, bits_ref, o_ref):
    """One (TILE_R, 128) tile: x_noisy = x + N(0,1) * noise_level.

    Dual-output Box-Muller: the top half of the tile's bits gives u1, the
    bottom half gives u2; r*cos(theta) covers the top half of the tile and
    r*sin(theta) covers the bottom half (independent standard normals).
    """
    nl = nl_ref[0]
    h = x_ref.shape[0] // 2  # static; tile rows are always even

    # uint32 -> uniform float32 in [0, 1): keep top 23 bits as the mantissa of
    # a float in [1, 2), then subtract 1.
    one_bits = jnp.uint32(0x3F800000)
    b1 = bits_ref[:h, :]
    b2 = bits_ref[h:, :]
    u1 = jax.lax.bitcast_convert_type((b1 >> 9) | one_bits, jnp.float32) - 1.0
    u2 = jax.lax.bitcast_convert_type((b2 >> 9) | one_bits, jnp.float32) - 1.0
    u1 = 1.0 - u1  # (0, 1] -> safe for log

    r = jnp.sqrt(-2.0 * jnp.log(u1))
    theta = (2.0 * jnp.pi) * u2
    z_a = r * jnp.cos(theta)
    z_b = r * jnp.sin(theta)

    x_a = x_ref[:h, :].astype(jnp.float32)
    x_b = x_ref[h:, :].astype(jnp.float32)
    o_ref[:h, :] = (x_a + z_a * nl).astype(o_ref.dtype)
    o_ref[h:, :] = (x_b + z_b * nl).astype(o_ref.dtype)


@functools.partial(jax.jit, static_argnames=("tile_r",))
def _diffusion_pallas_2d(nl_arr, x2d, bits2d, tile_r):
    rows, lanes = x2d.shape
    grid_r = rows // tile_r
    n_elems = rows * lanes
    itemsize = x2d.dtype.itemsize

    return pl.pallas_call(
        _diffusion_kernel,
        out_shape=jax.ShapeDtypeStruct((rows, lanes), x2d.dtype),
        grid=(grid_r,),
        in_specs=[
            pl.BlockSpec(memory_space=pltpu.MemorySpace.SMEM),      # noise_level (1,) f32
            pl.BlockSpec((tile_r, lanes), lambda i: (i, 0)),        # x tile
            pl.BlockSpec((tile_r, lanes), lambda i: (i, 0)),        # random bits tile
        ],
        out_specs=pl.BlockSpec((tile_r, lanes), lambda i: (i, 0)),
        compiler_params=pltpu.CompilerParams(
            dimension_semantics=("parallel",)),
        cost_estimate=pl.CostEstimate(
            flops=12 * n_elems,
            transcendentals=2 * n_elems,                 # (log+sqrt+cos+sin) / 2 elems
            bytes_accessed=(2 * itemsize + 4) * n_elems  # read x + write out + read bits
        ),
    )(nl_arr, x2d, bits2d)


class DiffusionProcess:
    """JAX/Pallas equivalent of the torch DiffusionProcess module."""

    def __init__(self, latent_dim):
        self.latent_dim = latent_dim  # unused by forward, kept for parity

    def forward(self, x, noise_level, *, seed=0):
        orig_shape = x.shape
        n = x.size
        rows = pl.cdiv(n, _LANES)

        # Tile choice: one full-extent block for small inputs, 1024-row tiles
        # (double-buffered by Pallas) for large ones.  Tile rows stay a
        # multiple of 16 so the Box-Muller half-split is sublane-aligned.
        if rows <= _MAX_TILE_ROWS:
            tile_r = _round_up(max(rows, 16), 16)
            padded_rows = tile_r
        else:
            tile_r = _MAX_TILE_ROWS
            padded_rows = _round_up(rows, tile_r)
        padded_n = padded_rows * _LANES

        flat = jnp.ravel(x)  # native dtype; reshape is free when contiguous
        if padded_n != n:
            flat = jnp.pad(flat, (0, padded_n - n))
        x2d = flat.reshape(padded_rows, _LANES)

        # On-device uniform bits (one uint32 per output element).
        key = jax.random.PRNGKey(seed)
        bits2d = jax.random.bits(key, (padded_rows, _LANES), dtype=jnp.uint32)

        nl_arr = jnp.asarray([noise_level], dtype=jnp.float32)
        out2d = _diffusion_pallas_2d(nl_arr, x2d, bits2d, tile_r)

        if padded_n != n:
            out = out2d.reshape(-1)[:n].reshape(orig_shape)
        else:
            out = out2d.reshape(orig_shape)
        print("After diffusion process:", tuple(out.shape))
        return out

    __call__ = forward


if __name__ == "__main__":
    key = jax.random.PRNGKey(0)
    # Small latent-ish input, NCHW like the torch module would see.
    x = jax.random.normal(key, (2, 4, 16, 16), dtype=jnp.float32)
    noise_level = 0.1

    model = DiffusionProcess(latent_dim=4 * 16 * 16)
    x_noisy = model(x, noise_level, seed=42)
    x_noisy = jax.block_until_ready(x_noisy)

    # Sanity: shape/dtype preserved, finite, perturbation consistent with
    # noise_level * N(0,1).
    assert x_noisy.shape == x.shape
    assert x_noisy.dtype == x.dtype
    assert bool(jnp.all(jnp.isfinite(x_noisy)))
    diff = x_noisy - x
    diff_std = float(jnp.std(diff))
    diff_mean = float(jnp.mean(diff))
    assert 0.07 < diff_std < 0.13, f"unexpected noise std {diff_std}"
    assert abs(diff_mean) < 0.02, f"unexpected noise mean {diff_mean}"

    print("KERNEL_OK")
</pallas_src>

<mosaic_0001>
module attributes {stable_mosaic.version = 11 : i64} {
  func.func @_diffusion_kernel(%arg0: i32, %arg1: memref<1xf32, #tpu.memory_space<smem>>, %arg2: memref<16x128xf32, #tpu.memory_space<vmem>>, %arg3: memref<16x128xi32, #tpu.memory_space<vmem>>, %arg4: memref<16x128xf32, #tpu.memory_space<vmem>>) attributes {dimension_semantics = [#tpu.dimension_semantics<parallel>], iteration_bounds = array<i64: 1>, scalar_prefetch = 0 : i64, scratch_operands = 0 : i64, tpu.core_type = #tpu.core_type<tc>, window_params = [{transform_indices = @transform_0, window_bounds = array<i64: 1>}, {transform_indices = @transform_1, window_bounds = array<i64: 16, 128>}, {transform_indices = @transform_2, window_bounds = array<i64: 16, 128>}, {transform_indices = @transform_3, window_bounds = array<i64: 16, 128>}]} {
    %c0 = arith.constant 0 : index
    %0 = memref.load %arg1[%c0] : memref<1xf32, #tpu.memory_space<smem>>
    %c0_0 = arith.constant 0 : index
    %c0_1 = arith.constant 0 : index
    %1 = vector.load %arg3[%c0_0, %c0_1] : memref<16x128xi32, #tpu.memory_space<vmem>>, vector<8x128xi32>
    %c8 = arith.constant 8 : index
    %c0_2 = arith.constant 0 : index
    %2 = vector.load %arg3[%c8, %c0_2] : memref<16x128xi32, #tpu.memory_space<vmem>>, vector<8x128xi32>
    %c9_i32 = arith.constant 9 : i32
    %3 = vector.broadcast %c9_i32 : i32 to vector<8x128xi32>
    %4 = arith.shrui %1, %3 : vector<8x128xi32>
    %c1065353216_i32 = arith.constant 1065353216 : i32
    %5 = vector.broadcast %c1065353216_i32 : i32 to vector<8x128xi32>
    %6 = arith.ori %4, %5 : vector<8x128xi32>
    %7 = tpu.bitcast %6 : vector<8x128xi32> -> vector<8x128xf32>
    %cst = arith.constant 1.000000e+00 : f32
    %8 = vector.broadcast %cst : f32 to vector<8x128xf32>
    %9 = arith.subf %7, %8 : vector<8x128xf32>
    %c9_i32_3 = arith.constant 9 : i32
    %10 = vector.broadcast %c9_i32_3 : i32 to vector<8x128xi32>
    %11 = arith.shrui %2, %10 : vector<8x128xi32>
    %c1065353216_i32_4 = arith.constant 1065353216 : i32
    %12 = vector.broadcast %c1065353216_i32_4 : i32 to vector<8x128xi32>
    %13 = arith.ori %11, %12 : vector<8x128xi32>
    %14 = tpu.bitcast %13 : vector<8x128xi32> -> vector<8x128xf32>
    %cst_5 = arith.constant 1.000000e+00 : f32
    %15 = vector.broadcast %cst_5 : f32 to vector<8x128xf32>
    %16 = arith.subf %14, %15 : vector<8x128xf32>
    %cst_6 = arith.constant 1.000000e+00 : f32
    %17 = vector.broadcast %cst_6 : f32 to vector<8x128xf32>
    %18 = arith.subf %17, %9 : vector<8x128xf32>
    %19 = math.log %18 : vector<8x128xf32>
    %cst_7 = arith.constant -2.000000e+00 : f32
    %20 = vector.broadcast %cst_7 : f32 to vector<8x128xf32>
    %21 = arith.mulf %20, %19 : vector<8x128xf32>
    %22 = math.sqrt %21 : vector<8x128xf32>
    %cst_8 = arith.constant 6.28318548 : f32
    %23 = vector.broadcast %cst_8 : f32 to vector<8x128xf32>
    %24 = arith.mulf %23, %16 : vector<8x128xf32>
    %25 = math.cos %24 : vector<8x128xf32>
    %26 = arith.mulf %22, %25 : vector<8x128xf32>
    %27 = math.sin %24 : vector<8x128xf32>
    %28 = arith.mulf %22, %27 : vector<8x128xf32>
    %c0_9 = arith.constant 0 : index
    %c0_10 = arith.constant 0 : index
    %29 = vector.load %arg2[%c0_9, %c0_10] : memref<16x128xf32, #tpu.memory_space<vmem>>, vector<8x128xf32>
    %c8_11 = arith.constant 8 : index
    %c0_12 = arith.constant 0 : index
    %30 = vector.load %arg2[%c8_11, %c0_12] : memref<16x128xf32, #tpu.memory_space<vmem>>, vector<8x128xf32>
    %31 = vector.broadcast %0 : f32 to vector<8x128xf32>
    %32 = arith.mulf %26, %31 : vector<8x128xf32>
    %33 = arith.addf %29, %32 : vector<8x128xf32>
    %c0_13 = arith.constant 0 : index
    %c0_14 = arith.constant 0 : index
    %34 = vector.load %arg4[%c0_13, %c0_14] : memref<16x128xf32, #tpu.memory_space<vmem>>, vector<8x128xf32>
    tpu.vector_store %arg4[%c0_13, %c0_14], %33 {strides = array<i32>} : memref<16x128xf32, #tpu.memory_space<vmem>>, vector<8x128xf32>,
    %35 = vector.broadcast %0 : f32 to vector<8x128xf32>
    %36 = arith.mulf %28, %35 : vector<8x128xf32>
    %37 = arith.addf %30, %36 : vector<8x128xf32>
    %c8_15 = arith.constant 8 : index
    %c0_16 = arith.constant 0 : index
    %38 = vector.load %arg4[%c8_15, %c0_16] : memref<16x128xf32, #tpu.memory_space<vmem>>, vector<8x128xf32>
    tpu.vector_store %arg4[%c8_15, %c0_16], %37 {strides = array<i32>} : memref<16x128xf32, #tpu.memory_space<vmem>>, vector<8x128xf32>,
    return
  }
  func.func @transform_0(%arg0: i32) -> i32 {
    %c0_i32 = arith.constant 0 : i32
    %c0_i32_0 = arith.constant 0 : i32
    return %c0_i32 : i32
  }
  func.func @transform_1(%arg0: i32) -> (i32, i32) {
    %c0_i32 = arith.constant 0 : i32
    %c0_i32_0 = arith.constant 0 : i32
    return %arg0, %c0_i32 : i32, i32
  }
  func.func @transform_2(%arg0: i32) -> (i32, i32) {
    %c0_i32 = arith.constant 0 : i32
    %c0_i32_0 = arith.constant 0 : i32
    return %arg0, %c0_i32 : i32, i32
  }
  func.func @transform_3(%arg0: i32) -> (i32, i32) {
    %c0_i32 = arith.constant 0 : i32
    %c0_i32_0 = arith.constant 0 : i32
    return %arg0, %c0_i32 : i32, i32
  }
}

</mosaic_0001>

<llo_original>
// kernel: _diffusion_pallas_2d.1
$region0: #{_diffusion_pallas_2d.1}
  #allocation0 [shape = 'u32[]', space=smem, size = 0x4, offset = 0x4, fixed_abs, tag = 'smem constant byte address 0x4 - core index']
  #allocation1 [shape = 'u32[144,128]{1,0:T(1,128)}', space=vmem, size = 0x12000, scoped, tag = 'internal scratch']
  #allocation2 [shape = 'f32[1]{0:T(128)S(6)}', space=smem, size = 0x200, scoped, tag = 'scoped memory for _diffusion_pallas_2d.1']
  %s0 = inlined_call_operand.<no memory space> [shape: f32[1], index: 0, kind: input, shape index: {}]
  %s1 = inlined_call_operand.hbm [shape: f32[16,128], index: 1, kind: input, shape index: {}]
  %s2 = inlined_call_operand.hbm [shape: u32[16,128], index: 2, kind: input, shape index: {}]
  %s3 = inlined_call_operand.hbm [shape: f32[16,128], index: 3, kind: output, shape index: {}]
  %s4 = sld [smem:[#allocation0]]
  $region30: #{_diffusion_pallas_2d.1} parent=0
    _
  %s6 = ssub.s32 1, %s4
  %s7 = scalar_select 0, %s6, %s4
  %8 = sst [smem:[#allocation2]] %s0
  $region1: #{_diffusion_pallas_2d.1} parent=0
    #allocation3 [shape = 'u8[8192]{0}', space=vmem, size = 0x2000, scoped, tag = 'input window, operand 1, single buffered']
    #allocation4 [shape = 's32[1]{0}', space=sflag, size = 0x4, scoped, tag = 'scoped memory for _diffusion_pallas_2d.1']
    #allocation5 [shape = 's32[1]{0}', space=sflag, size = 0x4, scoped, tag = 'scoped memory for _diffusion_pallas_2d.1']
    #allocation6 [shape = 'u8[8192]{0}', space=vmem, size = 0x2000, scoped, tag = 'input window, operand 2, single buffered']
    #allocation7 [shape = 's32[1]{0}', space=sflag, size = 0x4, scoped, tag = 'scoped memory for _diffusion_pallas_2d.1']
    #allocation8 [shape = 'u8[8192]{0}', space=vmem, size = 0x2000, scoped, tag = 'output window, operand 0, single buffered']
    %9 = vsyncpa [#allocation4], 0
    %10 = vsyncpa [#allocation7], 0
    %11 = vsyncpa [#allocation5], 0
    // Predicated region
    $region2: #{_diffusion_pallas_2d.1} parent=1 // pred_check
      _
    $region3: #{_diffusion_pallas_2d.1} parent=1 // pred_check_branch
      %13 = sbr.rel (0) target = $region5
    $region4: #{_diffusion_pallas_2d.1} parent=1 // pred_region
      _
    $region5: #{_diffusion_pallas_2d.1} parent=1 // pred_fallthru
      _
    // Predicated region
    $region6: #{_diffusion_pallas_2d.1} parent=1 // pred_check
      _
    $region7: #{_diffusion_pallas_2d.1} parent=1 // pred_check_branch
      %15 = sbr.rel (0) target = $region9
    $region8: #{_diffusion_pallas_2d.1} parent=1 // pred_region
      %s17 = ssub.s32 256, 256
      %18 = vsyncadd [#allocation4], %s17
      %s19 = sshll.u32 [#allocation3], 4
      %s20 = int_to_ptr.vmem [resolvable:$true] %s19
      %25 = dma.hbm_to_vmem [thread:$0]  %s1, 256, %s20, [#allocation4], 128, 128, 8
    $region9: #{_diffusion_pallas_2d.1} parent=1 // pred_fallthru
      _
    // Predicated region
    $region10: #{_diffusion_pallas_2d.1} parent=1 // pred_check
      _
    $region11: #{_diffusion_pallas_2d.1} parent=1 // pred_check_branch
      %27 = sbr.rel (0) target = $region13
    $region12: #{_diffusion_pallas_2d.1} parent=1 // pred_region
      %s29 = ssub.s32 256, 256
      %30 = vsyncadd [#allocation7], %s29
      %s31 = sshll.u32 [#allocation6], 4
      %s32 = int_to_ptr.vmem [resolvable:$true] %s31
      %37 = dma.hbm_to_vmem [thread:$0]  %s2, 256, %s32, [#allocation7], 128, 128, 8
    $region13: #{_diffusion_pallas_2d.1} parent=1 // pred_fallthru
      _
    // Predicated region
    $region14: #{_diffusion_pallas_2d.1} parent=1 // pred_check
      _
    $region15: #{_diffusion_pallas_2d.1} parent=1 // pred_check_branch
      %39 = sbr.rel (0) target = $region17
    $region16: #{_diffusion_pallas_2d.1} parent=1 // pred_region
      %40 = dma.done [#allocation4], 256
    $region17: #{_diffusion_pallas_2d.1} parent=1 // pred_fallthru
      _
    // Predicated region
    $region18: #{_diffusion_pallas_2d.1} parent=1 // pred_check
      _
    $region19: #{_diffusion_pallas_2d.1} parent=1 // pred_check_branch
      %42 = sbr.rel (0) target = $region21
    $region20: #{_diffusion_pallas_2d.1} parent=1 // pred_region
      %43 = dma.done [#allocation7], 256
    $region21: #{_diffusion_pallas_2d.1} parent=1 // pred_fallthru
      _
    %s44 = sld [smem:[#allocation2]]
    %v45 = vld [vmem:[#allocation6] sm:$0xff]
    %v46 = vld [vmem:[#allocation6 + $0x8] sm:$0xff]
    %v47 = vshrl.u32 %v45, 9
    %v48 = vor.u32 %v47, 1065353216
    %v50 = vsub.f32 %v48, 1.0
    %v51 = vshrl.u32 %v46, 9
    %v52 = vor.u32 %v51, 1065353216
    %v54 = vsub.f32 %v52, 1.0
    %v55 = vsub.f32 1.0, %v50
    %v56 = vlog2.pop %v55
    %v57 = vmul.f32 %v56, 0.6931472
    %v58 = vmul.f32 %v57, -2.0
    %v59 = vrsqrt.pop %v58
    %v60 = vmul.f32 %v58, %v59
    %vm61 = vcmp.eq.f32.partialorder %v58, inf
    %v62 = vsel %vm61, %v58, %v60
    %vm63 = vcmp.eq.f32.partialorder %v58, 0.0
    %v64 = vand.u32 %v58, 2147483648
    %v65 = vsel %vm63, %v64, %v62
    %v66 = vmul.f32 %v54, 6.2831855
    %v67 = vand.u32 2147483647, %v66
    %vm68 = vcmp.le.f32.partialorder %v67, 0.7853982
    %vm69 = vcmp.lt.s32.totalorder %v66, 0
    %v70 = vand.u32 %v66, 2139095040
    %v71 = vshrl.u32 %v70, 23
    %v72 = vsub.s32 %v71, 127
    %v73 = vand.u32 2147483647, %v66
    %v74 = vand.u32 %v73, 8388607
    %v75 = vor.u32 %v74, 8388608
    %v76 = vsub.s32 0, %v75
    %v77 = vadd.s32 %v72, 1
    %vm78 = vcmp.gt.s32.totalorder %v77, 0
    %v79 = vsel %vm78, %v77, 0
    %v80 = vshrl.u32 %v79, 5
    %v81 = vand.u32 %v79, 31
    %v82 = vsub.s32 32, %v81
    %v83 = vshrl.u32 683565275, %v82
    %v84 = vshll.u32 683565275, %v81
    %v85 = vshrl.u32 2475754826, %v82
    %v86 = vor.u32 %v84, %v85
    %v87 = vshll.u32 2475754826, %v81
    %v88 = vshrl.u32 2131351028, %v82
    %v89 = vor.u32 %v87, %v88
    %v90 = vshll.u32 2131351028, %v81
    %v91 = vshrl.u32 2102212464, %v82
    %v92 = vor.u32 %v90, %v91
    %v93 = vshll.u32 2102212464, %v81
    %v94 = vshrl.u32 920167782, %v82
    %v95 = vor.u32 %v93, %v94
    %v96 = vshll.u32 920167782, %v81
    %v97 = vshrl.u32 1326507024, %v82
    %v98 = vor.u32 %v96, %v97
    %vm99 = vcmp.lt.s32.totalorder %v80, 1
    %vm100 = vcmp.lt.s32.totalorder %v80, 2
    %vm101 = vcmp.lt.s32.totalorder %v80, 3
    %vm102 = vcmp.lt.s32.totalorder %v80, 4
    %v103 = vsel %vm99, %v83, %v86
    %v104 = vsel %vm102, %v92, 2102212464
    %v105 = vsel %vm101, %v89, %v104
    %v106 = vsel %vm100, %v103, %v105
    %v107 = vsel %vm99, %v86, %v89
    %v108 = vsel %vm102, %v95, 920167782
    %v109 = vsel %vm101, %v92, %v108
    %v110 = vsel %vm100, %v107, %v109
    %v111 = vsel %vm99, %v89, %v92
    %v112 = vsel %vm102, %v98, 1326507024
    %v113 = vsel %vm101, %v95, %v112
    %v114 = vsel %vm100, %v111, %v113
    %v115 = vshll.u32 %v75, 8
    %v116 = vmul.u32.u64.compose %v115, %v114
    %v117 = vextract.low.u32 %v116
    %v118 = vextract.high.u32 %v116
    %v119 = vmul.u32.u64.compose %v115, %v110
    %v120 = vextract.low.u32 %v119
    %v121 = vextract.high.u32 %v119
    %v122 = vmul.u32 %v115, %v106
    %v123 = vadd.s32 %v118, %v120
    %vm124 = vc.u32 %v118, %v120
    %v125 = vadd.s32 %v121, 1
    %v126 = vsel %vm124, %v125, %v121
    %v127 = vadd.s32 %v122, %v126
    %v128 = vadd.s32 %v127, 536870912
    %v129 = vshrl.u32 %v128, 30
    %v130 = vshll.u32 %v129, 30
    %v131 = vsub.s32 %v127, %v130
    %vm132 = vcmp.lt.s32.totalorder %v131, 0
    %v133 = vsub.s32 0, %v131
    %v134 = vsel %vm132, %v133, %v131
    %v135 = vclz %v134
    %v136 = vsub.s32 %v135, 2
    %vm137 = vcmp.gt.s32.totalorder 0, %v136
    %v138 = vsel %vm137, 0, %v136
    %v139 = vsub.s32 32, %v138
    %v140 = vshll.u32 %v131, %v138
    %v141 = vshrl.u32 %v123, %v139
    %v142 = vor.u32 %v140, %v141
    %v143 = vsub.s32 4294967266, %v138
    %v144 = vadd.s32 %v143, 127
    %v145 = vshll.u32 %v144, 23
    %v146 = vor.u32 4788187, %v145
    %v147 = vand.u32 2147483647, %v146
    %v149 = vcvt.s32.f32 %v142
    %v150 = vmul.f32 %v149, %v147
    %v151 = vxor.u32 %v150, 2147483648
    %v152 = vsel %vm69, %v151, %v150
    %v153 = vsub.s32 4, %v129
    %v154 = vsel %vm69, %v153, %v129
    %v155 = vsel %vm68, %v66, %v152
    %v156 = vsel %vm68, 0, %v154
    %v157 = vcosq.f32.pop %v155
    %v158 = vsinq.f32.pop %v155
    %vm159 = vweird.f32 %v66
    %v160 = vand.u32 %v156, 3
    %vm161 = vcmp.lt.s32.totalorder %v160, 2
    %vm162 = vcmp.eq.s32.totalorder %v160, 0
    %v163 = vxor.u32 %v158, 2147483648
    %v164 = vsel %vm162, %v157, %v163
    %vm165 = vcmp.eq.s32.totalorder %v160, 2
    %v166 = vxor.u32 %v157, 2147483648
    %v167 = vsel %vm165, %v166, %v158
    %v168 = vsel %vm161, %v164, %v167
    %v169 = vsel %vm159, nan, %v168
    %v170 = vmul.f32 %v65, %v169
    %v171 = vand.u32 2147483647, %v66
    %vm172 = vcmp.le.f32.partialorder %v171, 0.7853982
    %vm173 = vcmp.lt.s32.totalorder %v66, 0
    %v174 = vand.u32 %v66, 2139095040
    %v175 = vshrl.u32 %v174, 23
    %v176 = vsub.s32 %v175, 127
    %v177 = vand.u32 2147483647, %v66
    %v178 = vand.u32 %v177, 8388607
    %v179 = vor.u32 %v178, 8388608
    %v180 = vsub.s32 0, %v179
    %v181 = vadd.s32 %v176, 1
    %vm182 = vcmp.gt.s32.totalorder %v181, 0
    %v183 = vsel %vm182, %v181, 0
    %v184 = vshrl.u32 %v183, 5
    %v185 = vand.u32 %v183, 31
    %v186 = vsub.s32 32, %v185
    %v187 = vshrl.u32 683565275, %v186
    %v188 = vshll.u32 683565275, %v185
    %v189 = vshrl.u32 2475754826, %v186
    %v190 = vor.u32 %v188, %v189
    %v191 = vshll.u32 2475754826, %v185
    %v192 = vshrl.u32 2131351028, %v186
    %v193 = vor.u32 %v191, %v192
    %v194 = vshll.u32 2131351028, %v185
    %v195 = vshrl.u32 2102212464, %v186
    %v196 = vor.u32 %v194, %v195
    %v197 = vshll.u32 2102212464, %v185
    %v198 = vshrl.u32 920167782, %v186
    %v199 = vor.u32 %v197, %v198
    %v200 = vshll.u32 920167782, %v185
    %v201 = vshrl.u32 1326507024, %v186
    %v202 = vor.u32 %v200, %v201
    %vm203 = vcmp.lt.s32.totalorder %v184, 1
    %vm204 = vcmp.lt.s32.totalorder %v184, 2
    %vm205 = vcmp.lt.s32.totalorder %v184, 3
    %vm206 = vcmp.lt.s32.totalorder %v184, 4
    %v207 = vsel %vm203, %v187, %v190
    %v208 = vsel %vm206, %v196, 2102212464
    %v209 = vsel %vm205, %v193, %v208
    %v210 = vsel %vm204, %v207, %v209
    %v211 = vsel %vm203, %v190, %v193
    %v212 = vsel %vm206, %v199, 920167782
    %v213 = vsel %vm205, %v196, %v212
    %v214 = vsel %vm204, %v211, %v213
    %v215 = vsel %vm203, %v193, %v196
    %v216 = vsel %vm206, %v202, 1326507024
    %v217 = vsel %vm205, %v199, %v216
    %v218 = vsel %vm204, %v215, %v217
    %v219 = vshll.u32 %v179, 8
    %v220 = vmul.u32.u64.compose %v219, %v218
    %v221 = vextract.low.u32 %v220
    %v222 = vextract.high.u32 %v220
    %v223 = vmul.u32.u64.compose %v219, %v214
    %v224 = vextract.low.u32 %v223
    %v225 = vextract.high.u32 %v223
    %v226 = vmul.u32 %v219, %v210
    %v227 = vadd.s32 %v222, %v224
    %vm228 = vc.u32 %v222, %v224
    %v229 = vadd.s32 %v225, 1
    %v230 = vsel %vm228, %v229, %v225
    %v231 = vadd.s32 %v226, %v230
    %v232 = vadd.s32 %v231, 536870912
    %v233 = vshrl.u32 %v232, 30
    %v234 = vshll.u32 %v233, 30
    %v235 = vsub.s32 %v231, %v234
    %vm236 = vcmp.lt.s32.totalorder %v235, 0
    %v237 = vsub.s32 0, %v235
    %v238 = vsel %vm236, %v237, %v235
    %v239 = vclz %v238
    %v240 = vsub.s32 %v239, 2
    %vm241 = vcmp.gt.s32.totalorder 0, %v240
    %v242 = vsel %vm241, 0, %v240
    %v243 = vsub.s32 32, %v242
    %v244 = vshll.u32 %v235, %v242
    %v245 = vshrl.u32 %v227, %v243
    %v246 = vor.u32 %v244, %v245
    %v247 = vsub.s32 4294967266, %v242
    %v248 = vadd.s32 %v247, 127
    %v249 = vshll.u32 %v248, 23
    %v250 = vor.u32 4788187, %v249
    %v251 = vand.u32 2147483647, %v250
    %v253 = vcvt.s32.f32 %v246
    %v254 = vmul.f32 %v253, %v251
    %v255 = vxor.u32 %v254, 2147483648
    %v256 = vsel %vm173, %v255, %v254
    %v257 = vsub.s32 4, %v233
    %v258 = vsel %vm173, %v257, %v233
    %v259 = vsel %vm172, %v66, %v256
    %v260 = vsel %vm172, 0, %v258
    %v261 = vcosq.f32.pop %v259
    %v262 = vsinq.f32.pop %v259
    %vm263 = vweird.f32 %v66
    %v264 = vadd.s32 %v260, 3
    %v265 = vand.u32 %v264, 3
    %vm266 = vcmp.lt.s32.totalorder %v265, 2
    %vm267 = vcmp.eq.s32.totalorder %v265, 0
    %v268 = vxor.u32 %v262, 2147483648
    %v269 = vsel %vm267, %v261, %v268
    %vm270 = vcmp.eq.s32.totalorder %v265, 2
    %v271 = vxor.u32 %v261, 2147483648
    %v272 = vsel %vm270, %v271, %v262
    %v273 = vsel %vm266, %v269, %v272
    %v274 = vsel %vm263, nan, %v273
    %v275 = vmul.f32 %v65, %v274
    %v276 = vld [vmem:[#allocation3] sm:$0xff]
    %v277 = vld [vmem:[#allocation3 + $0x8] sm:$0xff]
    %v278 = vstv %s44
    %v279 = vmul.f32 %v170, %v278
    %v280 = vadd.f32 %v276, %v279
    %281 = vst [vmem:[#allocation8] sm:$0xff] %v280
    %v282 = vmul.f32 %v275, %v278
    %v283 = vadd.f32 %v277, %v282
    %284 = vst [vmem:[#allocation8 + $0x8] sm:$0xff] %v283
    // Predicated region
    $region22: #{_diffusion_pallas_2d.1} parent=1 // pred_check
      _
    $region23: #{_diffusion_pallas_2d.1} parent=1 // pred_check_branch
      %286 = sbr.rel (0) target = $region25
    $region24: #{_diffusion_pallas_2d.1} parent=1 // pred_region
      %s288 = ssub.s32 256, 256
      %289 = vsyncadd [#allocation5], %s288
      %s290 = sshll.u32 [#allocation8], 4
      %s291 = int_to_ptr.vmem [resolvable:$true] %s290
      %296 = dma.vmem_to_hbm [thread:$0]  %s291, 256, %s3, [#allocation5], 128, 128, 8
    $region25: #{_diffusion_pallas_2d.1} parent=1 // pred_fallthru
      _
    // Predicated region
    $region26: #{_diffusion_pallas_2d.1} parent=1 // pred_check
      _
    $region27: #{_diffusion_pallas_2d.1} parent=1 // pred_check_branch
      %298 = sbr.rel (0) target = $region29
    $region28: #{_diffusion_pallas_2d.1} parent=1 // pred_region
      %299 = dma.done [#allocation5], 256
    $region29: #{_diffusion_pallas_2d.1} parent=1 // pred_fallthru
      _
    %300 = vsyncpa [#allocation4], 1
    %301 = vsyncpa [#allocation7], 1
    %302 = vsyncpa [#allocation5], 1

</llo_original>
